<compile_context>
chip_gen: v7x
topology: tpu7x:2x2x1
jax: 0.10.0
libtpu: 0.0.40
codegen_flags: <defaults>
</compile_context>

<pallas_src>
import math

import jax
import jax.numpy as jnp
from jax.experimental import pallas as pl
from jax.experimental.pallas import tpu as pltpu


def _sinusoidal_table(c_in: int, d_model: int) -> jnp.ndarray:
    """Deterministic fixed sinusoidal embedding table (matches torch init)."""
    assert d_model % 2 == 0, "FixedEmbedding requires an even d_model"
    position = jnp.arange(c_in, dtype=jnp.float32)[:, None]          # (c_in, 1)
    div_term = jnp.exp(
        jnp.arange(0, d_model, 2, dtype=jnp.float32)
        * -(math.log(10000.0) / d_model)
    )                                                                 # (d_model//2,)
    w = jnp.zeros((c_in, d_model), dtype=jnp.float32)
    w = w.at[:, 0::2].set(jnp.sin(position * div_term))
    w = w.at[:, 1::2].set(jnp.cos(position * div_term))
    return w


def _round_up(a: int, b: int) -> int:
    return ((a + b - 1) // b) * b


def _pack_factor(c_in: int, d_model: int, max_table_bytes: int = 4 << 20) -> int:
    """Tokens packed per output row so rows are lane-dense (target 256 lanes)."""
    p = 1
    for lane_target in (256, 128):
        if d_model < lane_target and lane_target % d_model == 0:
            p = lane_target // d_model
            break
    # Keep the block-diagonal table comfortably small / VMEM-resident.
    while p > 1 and (p * c_in) * (p * d_model) * 4 > max_table_bytes:
        p //= 2
    return max(p, 1)


def _choose_tile(rows: int, cap: int) -> int:
    """Largest row tile <= cap, keeping >=4 grid steps when there is real work."""
    cap = max(8, _round_up(int(cap), 8))
    min_steps = 4
    tile = cap
    if rows > min_steps * 512:
        # Enough work: several steps so megacore (v7x) has blocks for both
        # TensorCores and the pipeline stays >=2 deep, but keep blocks >=512 rows.
        tile = min(tile, max(512, _round_up(pl.cdiv(rows, min_steps), 8)))
    if rows <= tile:
        return rows                      # single full-array block (always legal)
    return max(8, _round_up(tile, 8))


def _make_kernel(c_in: int):
    def kernel(idx_ref, w_ref, out_ref):
        # idx_ref: (tile, P) int32 token ids (OOB already mapped to a sentinel).
        # w_ref:   (P*c_in, P*d_model) f32 block-diagonal table (plain table if P==1).
        # out_ref: (tile, P*d_model) f32 — lane-dense packed rows.
        rows, p = idx_ref.shape
        k = w_ref.shape[0]                               # P * c_in one-hot columns

        idx = idx_ref[...]                               # single load of the block
        # Token slot j targets the j-th c_in-wide column block of the one-hot.
        slot_off = jax.lax.broadcasted_iota(jnp.int32, (rows, p), 1) * c_in
        tgt = idx + slot_off                             # (rows, P)

        lane = jax.lax.broadcasted_iota(jnp.int32, (rows, k), 1)
        hit = lane == tgt[:, 0:1]
        for j in range(1, p):                            # static, tiny, disjoint matches
            hit = jnp.logical_or(hit, lane == tgt[:, j:j + 1])
        onehot = hit.astype(jnp.float32)                 # exact 0.0 / 1.0

        # One MXU matmul emits all P embeddings of a row as a single lane-dense
        # (256-lane) store.  f32 operands keep the gather bit-exact vs the f32
        # table (bf16 would be faster but quantise the embedding values).
        out_ref[...] = jnp.dot(
            onehot, w_ref[...], preferred_element_type=jnp.float32
        ).astype(out_ref.dtype)

    return kernel


def fixed_embedding(x: jnp.ndarray, weight: jnp.ndarray, *, tile_rows: int = 4096):
    """Pallas equivalent of FixedEmbedding.forward: weight[x] from the frozen table.

    x: integer indices of any shape; weight: (c_in, d_model) float32 table.
    Out-of-range / negative indices produce an all-zero row (documented contract).
    """
    c_in, d_model = weight.shape
    lead_shape = x.shape
    n = int(x.size)
    if n == 0:
        return jnp.zeros((*lead_shape, d_model), weight.dtype)

    p = _pack_factor(c_in, d_model)

    idx = x.reshape(-1).astype(jnp.int32)
    # Preserve the "all-zero row" OOB contract in the packed layout: remap
    # invalid ids to a sentinel that can never match any one-hot column.
    idx = jnp.where((idx >= 0) & (idx < c_in), idx, jnp.int32(-(1 << 24)))

    n_pad = _round_up(n, p)                               # pad only to a multiple of P
    if n_pad > n:
        idx = jnp.pad(idx, (0, n_pad - n))
    rows = n_pad // p
    idx2d = idx.reshape(rows, p)

    if p == 1:
        w_big = weight.astype(jnp.float32)
    else:
        w_big = jnp.zeros((p * c_in, p * d_model), jnp.float32)
        for j in range(p):
            w_big = w_big.at[
                j * c_in:(j + 1) * c_in, j * d_model:(j + 1) * d_model
            ].set(weight.astype(jnp.float32))

    tile = _choose_tile(rows, tile_rows)
    grid = (pl.cdiv(rows, tile),)                         # ragged last block allowed

    # VMEM budget: double-buffered idx/out/table blocks + in-kernel temporaries.
    blk_out = tile * p * d_model * 4
    blk_idx = tile * p * 4
    blk_tab = (p * c_in) * (p * d_model) * 4
    temps = 3 * tile * (p * c_in) * 4
    vmem_limit = int(min(max(2 * (blk_out + blk_idx + blk_tab) + temps + (2 << 20),
                             32 << 20),
                         48 << 20))                       # safe on v5e/v6e/v7x

    out_packed = pl.pallas_call(
        _make_kernel(c_in),
        out_shape=jax.ShapeDtypeStruct((rows, p * d_model), weight.dtype),
        grid=grid,
        in_specs=[
            pl.BlockSpec((tile, p), lambda i: (i, 0)),
            # Constant index_map -> the tiny table stays VMEM-resident.
            pl.BlockSpec((p * c_in, p * d_model), lambda i: (0, 0)),
        ],
        out_specs=pl.BlockSpec((tile, p * d_model), lambda i: (i, 0)),
        compiler_params=pltpu.CompilerParams(
            dimension_semantics=("parallel",),            # megacore on v7x
            vmem_limit_bytes=vmem_limit,
        ),
    )(idx2d, w_big)

    out_flat = out_packed.reshape(rows * p, d_model)
    if n_pad > n:                                         # slice only if we padded
        out_flat = out_flat[:n]
    return out_flat.reshape(*lead_shape, d_model)


if __name__ == "__main__":
    # Shapes consistent with the module: c_in=16 vocabulary, d_model=32.
    c_in, d_model = 16, 32
    weight = _sinusoidal_table(c_in, d_model)

    key = jax.random.PRNGKey(0)
    k1, k2, k3 = jax.random.split(key, 3)

    # Case 1: batch=2, seq=8 -> single full-array block, no padding, no slice.
    x1 = jax.random.randint(k1, (2, 8), minval=0, maxval=c_in, dtype=jnp.int32)
    o1 = jax.block_until_ready(fixed_embedding(x1, weight))
    assert o1.shape == (2, 8, d_model)
    assert o1.dtype == jnp.float32
    assert jnp.allclose(o1, weight[x1], atol=1e-6), "mismatch vs reference gather"

    # Case 2: multi-step grid with a ragged final block (tile cap forced small).
    x2 = jax.random.randint(k2, (2, 40), minval=0, maxval=c_in, dtype=jnp.int32)
    o2 = jax.block_until_ready(fixed_embedding(x2, weight, tile_rows=8))
    assert o2.shape == (2, 40, d_model)
    assert jnp.allclose(o2, weight[x2], atol=1e-6), "mismatch vs reference (tiled/ragged)"

    # Case 3: token count not a multiple of the packing factor (pad+slice path).
    x3 = jax.random.randint(k3, (3, 7), minval=0, maxval=c_in, dtype=jnp.int32)
    o3 = jax.block_until_ready(fixed_embedding(x3, weight))
    assert o3.shape == (3, 7, d_model)
    assert jnp.allclose(o3, weight[x3], atol=1e-6), "mismatch vs reference (padded)"

    print("KERNEL_OK")
</pallas_src>

<mosaic_0001>
module attributes {stable_mosaic.version = 11 : i64} {
  func.func @kernel(%arg0: i32, %arg1: memref<2x8xi32, #tpu.memory_space<vmem>>, %arg2: memref<128x256xf32, #tpu.memory_space<vmem>>, %arg3: memref<2x256xf32, #tpu.memory_space<vmem>>) attributes {dimension_semantics = [#tpu.dimension_semantics<parallel>], iteration_bounds = array<i64: 1>, scalar_prefetch = 0 : i64, scratch_operands = 0 : i64, tpu.core_type = #tpu.core_type<tc>, window_params = [{transform_indices = @transform_0, window_bounds = array<i64: 2, 8>}, {pipeline_mode = #tpu.pipeline_mode<synchronous>, transform_indices = @transform_1, window_bounds = array<i64: 128, 256>}, {transform_indices = @transform_2, window_bounds = array<i64: 2, 256>}]} {
    %c0 = arith.constant 0 : index
    %c0_0 = arith.constant 0 : index
    %0 = vector.load %arg1[%c0, %c0_0] : memref<2x8xi32, #tpu.memory_space<vmem>>, vector<2x8xi32>
    %1 = tpu.iota {dimensions = array<i32: 1>} : vector<2x8xi32>
    %c16_i32 = arith.constant 16 : i32
    %2 = vector.broadcast %c16_i32 : i32 to vector<2x8xi32>
    %3 = arith.muli %1, %2 : vector<2x8xi32>
    %4 = arith.addi %0, %3 : vector<2x8xi32>
    %5 = tpu.iota {dimensions = array<i32: 1>} : vector<2x128xi32>
    %6 = vector.extract_strided_slice %4 {offsets = [0, 0], sizes = [2, 1], strides = [1, 1]} : vector<2x8xi32> to vector<2x1xi32>
    %7 = vector.broadcast %6 : vector<2x1xi32> to vector<2x128xi32>
    %8 = arith.cmpi eq, %5, %7 : vector<2x128xi32>
    %9 = vector.extract_strided_slice %4 {offsets = [0, 1], sizes = [2, 1], strides = [1, 1]} : vector<2x8xi32> to vector<2x1xi32>
    %10 = vector.broadcast %9 : vector<2x1xi32> to vector<2x128xi32>
    %11 = arith.cmpi eq, %5, %10 : vector<2x128xi32>
    %12 = arith.ori %8, %11 : vector<2x128xi1>
    %13 = vector.extract_strided_slice %4 {offsets = [0, 2], sizes = [2, 1], strides = [1, 1]} : vector<2x8xi32> to vector<2x1xi32>
    %14 = vector.broadcast %13 : vector<2x1xi32> to vector<2x128xi32>
    %15 = arith.cmpi eq, %5, %14 : vector<2x128xi32>
    %16 = arith.ori %12, %15 : vector<2x128xi1>
    %17 = vector.extract_strided_slice %4 {offsets = [0, 3], sizes = [2, 1], strides = [1, 1]} : vector<2x8xi32> to vector<2x1xi32>
    %18 = vector.broadcast %17 : vector<2x1xi32> to vector<2x128xi32>
    %19 = arith.cmpi eq, %5, %18 : vector<2x128xi32>
    %20 = arith.ori %16, %19 : vector<2x128xi1>
    %21 = vector.extract_strided_slice %4 {offsets = [0, 4], sizes = [2, 1], strides = [1, 1]} : vector<2x8xi32> to vector<2x1xi32>
    %22 = vector.broadcast %21 : vector<2x1xi32> to vector<2x128xi32>
    %23 = arith.cmpi eq, %5, %22 : vector<2x128xi32>
    %24 = arith.ori %20, %23 : vector<2x128xi1>
    %25 = vector.extract_strided_slice %4 {offsets = [0, 5], sizes = [2, 1], strides = [1, 1]} : vector<2x8xi32> to vector<2x1xi32>
    %26 = vector.broadcast %25 : vector<2x1xi32> to vector<2x128xi32>
    %27 = arith.cmpi eq, %5, %26 : vector<2x128xi32>
    %28 = arith.ori %24, %27 : vector<2x128xi1>
    %29 = vector.extract_strided_slice %4 {offsets = [0, 6], sizes = [2, 1], strides = [1, 1]} : vector<2x8xi32> to vector<2x1xi32>
    %30 = vector.broadcast %29 : vector<2x1xi32> to vector<2x128xi32>
    %31 = arith.cmpi eq, %5, %30 : vector<2x128xi32>
    %32 = arith.ori %28, %31 : vector<2x128xi1>
    %33 = vector.extract_strided_slice %4 {offsets = [0, 7], sizes = [2, 1], strides = [1, 1]} : vector<2x8xi32> to vector<2x1xi32>
    %34 = vector.broadcast %33 : vector<2x1xi32> to vector<2x128xi32>
    %35 = arith.cmpi eq, %5, %34 : vector<2x128xi32>
    %36 = arith.ori %32, %35 : vector<2x128xi1>
    %37 = arith.extui %36 : vector<2x128xi1> to vector<2x128xi32>
    %38 = arith.sitofp %37 : vector<2x128xi32> to vector<2x128xf32>
    %c0_1 = arith.constant 0 : index
    %c0_2 = arith.constant 0 : index
    %39 = vector.load %arg2[%c0_1, %c0_2] : memref<128x256xf32, #tpu.memory_space<vmem>>, vector<128x256xf32>
    %cst = arith.constant dense<0.000000e+00> : vector<2x256xf32>
    %40 = tpu.matmul %38, %39, %cst {dimension_numbers = #tpu.dot_dimension_numbers<[1], [0], [0], [1], [0, 0, 1, 1], [], []>} : vector<2x128xf32>, vector<128x256xf32>, vector<2x256xf32> -> vector<2x256xf32>
    %c0_3 = arith.constant 0 : index
    %c0_4 = arith.constant 0 : index
    %41 = vector.load %arg3[%c0_3, %c0_4] : memref<2x256xf32, #tpu.memory_space<vmem>>, vector<2x256xf32>
    tpu.vector_store %arg3[%c0_3, %c0_4], %40 {strides = array<i32>} : memref<2x256xf32, #tpu.memory_space<vmem>>, vector<2x256xf32>,
    return
  }
  func.func @transform_0(%arg0: i32) -> (i32, i32) {
    %c0_i32 = arith.constant 0 : i32
    %c0_i32_0 = arith.constant 0 : i32
    return %arg0, %c0_i32 : i32, i32
  }
  func.func @transform_1(%arg0: i32) -> (i32, i32) {
    %c0_i32 = arith.constant 0 : i32
    %c0_i32_0 = arith.constant 0 : i32
    %c0_i32_1 = arith.constant 0 : i32
    return %c0_i32, %c0_i32_0 : i32, i32
  }
  func.func @transform_2(%arg0: i32) -> (i32, i32) {
    %c0_i32 = arith.constant 0 : i32
    %c0_i32_0 = arith.constant 0 : i32
    return %arg0, %c0_i32 : i32, i32
  }
}

</mosaic_0001>

<llo_original>
// kernel: tpu_custom_call.1
$region0: #{tpu_custom_call.1}
  #allocation0 [shape = 'u32[]', space=smem, size = 0x4, offset = 0x4, fixed_abs, tag = 'smem constant byte address 0x4 - core index']
  #allocation1 [shape = 'u32[144,128]{1,0:T(1,128)}', space=vmem, size = 0x12000, scoped, tag = 'internal scratch']
  %s0 = inlined_call_operand.hbm [shape: s32[2,8], index: 0, kind: input, shape index: {}]
  %s1 = inlined_call_operand.hbm [shape: f32[128,256], index: 1, kind: input, shape index: {}]
  %s2 = inlined_call_operand.hbm [shape: f32[2,256], index: 2, kind: output, shape index: {}]
  %s3 = sld [smem:[#allocation0]]
  $region26: #{tpu_custom_call.1} parent=0
    _
  %s5 = ssub.s32 1, %s3
  %s6 = scalar_select 0, %s5, %s3
  $region1: #{tpu_custom_call.1} parent=0
    #allocation2 [shape = 'u8[1024]{0}', space=vmem, size = 0x400, scoped, tag = 'input window, operand 0, single buffered']
    #allocation3 [shape = 's32[1]{0}', space=sflag, size = 0x4, scoped, tag = 'scoped memory for tpu_custom_call.1']
    #allocation4 [shape = 's32[1]{0}', space=sflag, size = 0x4, scoped, tag = 'scoped memory for tpu_custom_call.1']
    #allocation5 [shape = 'u8[131072]{0}', space=vmem, size = 0x20000, scoped, tag = 'input window, operand 1, single buffered']
    #allocation6 [shape = 's32[1]{0}', space=sflag, size = 0x4, scoped, tag = 'scoped memory for tpu_custom_call.1']
    #allocation7 [shape = 'u8[2048]{0}', space=vmem, size = 0x800, scoped, tag = 'output window, operand 0, single buffered']
    %7 = vsyncpa [#allocation3], 0
    %8 = vsyncpa [#allocation6], 0
    %9 = vsyncpa [#allocation4], 0
    // Predicated region
    $region2: #{tpu_custom_call.1} parent=1 // pred_check
      _
    $region3: #{tpu_custom_call.1} parent=1 // pred_check_branch
      %11 = sbr.rel (0) target = $region5
    $region4: #{tpu_custom_call.1} parent=1 // pred_region
      %s13 = ssub.s32 32, 32
      %14 = vsyncadd [#allocation3], %s13
      %s16 = sshll.u32 [#allocation2], 4
      %s17 = int_to_ptr.vmem [resolvable:$true] %s16
      %19 = dma.hbm_to_vmem [thread:$0]  %s0, 32, %s17, [#allocation3]
    $region5: #{tpu_custom_call.1} parent=1 // pred_fallthru
      _
    // Predicated region
    $region6: #{tpu_custom_call.1} parent=1 // pred_check
      _
    $region7: #{tpu_custom_call.1} parent=1 // pred_check_branch
      %21 = sbr.rel (0) target = $region9
    $region8: #{tpu_custom_call.1} parent=1 // pred_region
      %s23 = ssub.s32 4096, 4096
      %24 = vsyncadd [#allocation6], %s23
      %s25 = sshll.u32 [#allocation5], 4
      %s26 = int_to_ptr.vmem [resolvable:$true] %s25
      %31 = dma.hbm_to_vmem [thread:$0]  %s1, 4096, %s26, [#allocation6], 256, 256, 16
    $region9: #{tpu_custom_call.1} parent=1 // pred_fallthru
      _
    // Predicated region
    $region10: #{tpu_custom_call.1} parent=1 // pred_check
      _
    $region11: #{tpu_custom_call.1} parent=1 // pred_check_branch
      %33 = sbr.rel (0) target = $region13
    $region12: #{tpu_custom_call.1} parent=1 // pred_region
      %34 = dma.done [#allocation3], 32
    $region13: #{tpu_custom_call.1} parent=1 // pred_fallthru
      _
    // Predicated region
    $region14: #{tpu_custom_call.1} parent=1 // pred_check
      _
    $region15: #{tpu_custom_call.1} parent=1 // pred_check_branch
      %36 = sbr.rel (0) target = $region17
    $region16: #{tpu_custom_call.1} parent=1 // pred_region
      %37 = dma.done [#allocation6], 4096
    $region17: #{tpu_custom_call.1} parent=1 // pred_fallthru
      _
    %v38 = vld [vmem:[#allocation2] sm:$0x3]
    %v39 = vlaneseq
    %v40 = vand.u32 %v39, 127
    %v41 = vmul.u32 %v40, 16
    %v42 = vadd.s32 %v38, %v41
    %43 = vset.pattern.permute.xlu0 0
    %44 = vperm.xlu0 %43, %v42
    %v45 = vpop.permute.xlu0 %44
    %vm46 = vcmp.eq.s32.totalorder %v40, %v45
    %47 = vset.pattern.permute.xlu0 1
    %48 = vperm.xlu0 %47, %v42
    %v49 = vpop.permute.xlu0 %48
    %vm50 = vcmp.eq.s32.totalorder %v40, %v49
    %vm51 = vmor %vm46, %vm50
    %52 = vset.pattern.permute.xlu0 2
    %53 = vperm.xlu0 %52, %v42
    %v54 = vpop.permute.xlu0 %53
    %vm55 = vcmp.eq.s32.totalorder %v40, %v54
    %vm56 = vmor %vm51, %vm55
    %57 = vset.pattern.permute.xlu0 3
    %58 = vperm.xlu0 %57, %v42
    %v59 = vpop.permute.xlu0 %58
    %vm60 = vcmp.eq.s32.totalorder %v40, %v59
    %vm61 = vmor %vm56, %vm60
    %62 = vset.pattern.permute.xlu0 4
    %63 = vperm.xlu0 %62, %v42
    %v64 = vpop.permute.xlu0 %63
    %vm65 = vcmp.eq.s32.totalorder %v40, %v64
    %vm66 = vmor %vm61, %vm65
    %67 = vset.pattern.permute.xlu0 5
    %68 = vperm.xlu0 %67, %v42
    %v69 = vpop.permute.xlu0 %68
    %vm70 = vcmp.eq.s32.totalorder %v40, %v69
    %vm71 = vmor %vm66, %vm70
    %72 = vset.pattern.permute.xlu0 6
    %73 = vperm.xlu0 %72, %v42
    %v74 = vpop.permute.xlu0 %73
    %vm75 = vcmp.eq.s32.totalorder %v40, %v74
    %vm76 = vmor %vm71, %vm75
    %77 = vset.pattern.permute.xlu0 7
    %78 = vperm.xlu0 %77, %v42
    %v79 = vpop.permute.xlu0 %78
    %vm80 = vcmp.eq.s32.totalorder %v40, %v79
    %vm81 = vmor %vm76, %vm80
    %v82 = vsel %vm81, 1, 0
    %v83 = vcvt.s32.f32 %v82
    %v84 = vld [vmem:[#allocation5] sm:$0xff]
    %v85 = vld [vmem:[#allocation5 + $0x8] sm:$0xff]
    %v86 = vld [vmem:[#allocation5 + $0x10] sm:$0xff]
    %v87 = vld [vmem:[#allocation5 + $0x18] sm:$0xff]
    %v88 = vld [vmem:[#allocation5 + $0x20] sm:$0xff]
    %v89 = vld [vmem:[#allocation5 + $0x28] sm:$0xff]
    %v90 = vld [vmem:[#allocation5 + $0x30] sm:$0xff]
    %v91 = vld [vmem:[#allocation5 + $0x38] sm:$0xff]
    %v92 = vld [vmem:[#allocation5 + $0x40] sm:$0xff]
    %v93 = vld [vmem:[#allocation5 + $0x48] sm:$0xff]
    %v94 = vld [vmem:[#allocation5 + $0x50] sm:$0xff]
    %v95 = vld [vmem:[#allocation5 + $0x58] sm:$0xff]
    %v96 = vld [vmem:[#allocation5 + $0x60] sm:$0xff]
    %v97 = vld [vmem:[#allocation5 + $0x68] sm:$0xff]
    %v98 = vld [vmem:[#allocation5 + $0x70] sm:$0xff]
    %v99 = vld [vmem:[#allocation5 + $0x78] sm:$0xff]
    %v100 = vld [vmem:[#allocation5 + $0x80] sm:$0xff]
    %v101 = vld [vmem:[#allocation5 + $0x88] sm:$0xff]
    %v102 = vld [vmem:[#allocation5 + $0x90] sm:$0xff]
    %v103 = vld [vmem:[#allocation5 + $0x98] sm:$0xff]
    %v104 = vld [vmem:[#allocation5 + $0xa0] sm:$0xff]
    %v105 = vld [vmem:[#allocation5 + $0xa8] sm:$0xff]
    %v106 = vld [vmem:[#allocation5 + $0xb0] sm:$0xff]
    %v107 = vld [vmem:[#allocation5 + $0xb8] sm:$0xff]
    %v108 = vld [vmem:[#allocation5 + $0xc0] sm:$0xff]
    %v109 = vld [vmem:[#allocation5 + $0xc8] sm:$0xff]
    %v110 = vld [vmem:[#allocation5 + $0xd0] sm:$0xff]
    %v111 = vld [vmem:[#allocation5 + $0xd8] sm:$0xff]
    %v112 = vld [vmem:[#allocation5 + $0xe0] sm:$0xff]
    %v113 = vld [vmem:[#allocation5 + $0xe8] sm:$0xff]
    %v114 = vld [vmem:[#allocation5 + $0xf0] sm:$0xff]
    %v115 = vld [vmem:[#allocation5 + $0xf8] sm:$0xff]
    %116 = vmatprep.subr.mxu0 %v85
    %117 = vmatpush1.msra.mxu0 %v84
    %118 = vmatprep.subr.mxu0 %v87
    %119 = vmatpush1.msra.mxu0 %v86
    %120 = vmatprep.subr.mxu0 %v89
    %121 = vmatpush1.msra.mxu0 %v88
    %122 = vmatprep.subr.mxu0 %v91
    %123 = vmatpush1.msra.mxu0 %v90
    %124 = vmatprep.subr.mxu0 %v93
    %125 = vmatpush1.msra.mxu0 %v92
    %126 = vmatprep.subr.mxu0 %v95
    %127 = vmatpush1.msra.mxu0 %v94
    %128 = vmatprep.subr.mxu0 %v97
    %129 = vmatpush1.msra.mxu0 %v96
    %130 = vmatprep.subr.mxu0 %v99
    %131 = vmatpush1.msra.mxu0 %v98
    %132 = vmatprep.subr.mxu0 %v101
    %133 = vmatpush1.msra.mxu0 %v100
    %134 = vmatprep.subr.mxu0 %v103
    %135 = vmatpush1.msra.mxu0 %v102
    %136 = vmatprep.subr.mxu0 %v105
    %137 = vmatpush1.msra.mxu0 %v104
    %138 = vmatprep.subr.mxu0 %v107
    %139 = vmatpush1.msra.mxu0 %v106
    %140 = vmatprep.subr.mxu0 %v109
    %141 = vmatpush1.msra.mxu0 %v108
    %142 = vmatprep.subr.mxu0 %v111
    %143 = vmatpush1.msra.mxu0 %v110
    %144 = vmatprep.subr.mxu0 %v113
    %145 = vmatpush1.msra.mxu0 %v112
    %146 = vmatprep.subr.mxu0 %v115
    %147 = vmatpush1.msra.mxu0 %v114
    %148 = vmatprep.subr.mxu0 0.0
    %149 = vmatpush1.msra.mxu0 0.0
    %150 = vmatprep.subr.mxu0 0.0
    %151 = vmatpush1.msra.mxu0 0.0
    %152 = vmatprep.subr.mxu0 0.0
    %153 = vmatpush1.msra.mxu0 0.0
    %154 = vmatprep.subr.mxu0 0.0
    %155 = vmatpush1.msra.mxu0 0.0
    %156 = vmatprep.subr.mxu0 0.0
    %157 = vmatpush1.msra.mxu0 0.0
    %158 = vmatprep.subr.mxu0 0.0
    %159 = vmatpush1.msra.mxu0 0.0
    %160 = vmatprep.subr.mxu0 0.0
    %161 = vmatpush1.msra.mxu0 0.0
    %162 = vmatprep.subr.mxu0 0.0
    %163 = vmatpush1.msra.mxu0 0.0
    %164 = vmatprep.subr.mxu0 0.0
    %165 = vmatpush1.msra.mxu0 0.0
    %166 = vmatprep.subr.mxu0 0.0
    %167 = vmatpush1.msra.mxu0 0.0
    %168 = vmatprep.subr.mxu0 0.0
    %169 = vmatpush1.msra.mxu0 0.0
    %170 = vmatprep.subr.mxu0 0.0
    %171 = vmatpush1.msra.mxu0 0.0
    %172 = vmatprep.subr.mxu0 0.0
    %173 = vmatpush1.msra.mxu0 0.0
    %174 = vmatprep.subr.mxu0 0.0
    %175 = vmatpush1.msra.mxu0 0.0
    %176 = vmatprep.subr.mxu0 0.0
    %177 = vmatpush1.msra.mxu0 0.0
    %178 = vmatprep.subr.mxu0 0.0
    %179 = vmatpush1.msra.mxu0 0.0
    %180 = vmatprep.mubr.f32.mxu0 0.0
    %181 = vmatmul.mubr.f32.gmra.mrb[0].mxu0 %v83
    %v182 = vpop.f32.mrb[0].mxu0
    %v183 = vadd.f32 0.0, %v182
    %v184 = vpop.f32.mrb[0].mxu0
    %v185 = vadd.f32 0.0, %v184
    %186 = vdwg.mxu0
    %v189 = vcombine.low %v183, %v185
    %v191 = vunpack.c.l.s4 1983009808
    %v192 = vunpack.c.0.s8 %v191
    %v193 = vlaneseq
    %v194 = vshrl.u32 %v193, 7
    %v195 = vsub.s32 %v192, %v194
    %v196 = vrot.slane %v189, %v195
    %198 = vst [vmem:[#allocation7] sm:$0xf] %v196
    // Predicated region
    $region18: #{tpu_custom_call.1} parent=1 // pred_check
      _
    $region19: #{tpu_custom_call.1} parent=1 // pred_check_branch
      %200 = sbr.rel (0) target = $region21
    $region20: #{tpu_custom_call.1} parent=1 // pred_region
      %s202 = ssub.s32 64, 64
      %203 = vsyncadd [#allocation4], %s202
      %s205 = sshll.u32 [#allocation7], 4
      %s206 = int_to_ptr.vmem [resolvable:$true] %s205
      %208 = dma.vmem_to_hbm [thread:$0]  %s206, 64, %s2, [#allocation4]
    $region21: #{tpu_custom_call.1} parent=1 // pred_fallthru
      _
    // Predicated region
    $region22: #{tpu_custom_call.1} parent=1 // pred_check
      _
    $region23: #{tpu_custom_call.1} parent=1 // pred_check_branch
      %210 = sbr.rel (0) target = $region25
    $region24: #{tpu_custom_call.1} parent=1 // pred_region
      %211 = dma.done [#allocation4], 64
    $region25: #{tpu_custom_call.1} parent=1 // pred_fallthru
      _
    %212 = vsyncpa [#allocation3], 1
    %213 = vsyncpa [#allocation6], 1
    %214 = vsyncpa [#allocation4], 1

</llo_original>
